<compile_context>
chip_gen: v6e
topology: v6e:2x2x1
jax: 0.10.0
libtpu: 0.0.40
codegen_flags: <defaults>
</compile_context>

<pallas_src>
import jax
import jax.numpy as jnp
from jax import lax
from jax.experimental import pallas as pl
from jax.experimental.pallas import tpu as pltpu


_VMEM_BUDGET = 48 * 1024 * 1024  # leaves headroom on v7x's 64 MiB/TC; fine on v5e/v6e


def value_net_kernel(x_ref, w1_ref, b1_ref, w2_ref, b2_ref, o_ref):
    # x_ref : [TB, S]  natural batch-major tile of the states
    # w1_ref: [H, S]   fc1.weight (PyTorch layout), VMEM-resident
    # b1_ref: [H, 1]   fc1.bias as a column, VMEM-resident
    # w2_ref: [H, 1]   fc2.weight as a column, VMEM-resident
    # b2_ref: [1, 1]   fc2.bias scalar (SMEM)
    # o_ref : [1, TB]  lane-dense value row (batch on lanes)
    x = x_ref[...]
    if x.dtype != w1_ref.dtype:
        # bf16 path: cast after the load (free VPU work; no extra HBM pass).
        x = x.astype(w1_ref.dtype)
    # fc1 on the MXU: contract S (last dim of both operands, A @ B.T form) so
    # batch lands on the lane axis of the result; f32 accumulation.
    h = lax.dot_general(
        w1_ref[...], x,
        dimension_numbers=(((1,), (1,)), ((), ())),
        preferred_element_type=jnp.float32)                    # [H, TB]
    h = jnp.maximum(h + b1_ref[...], 0.0)                      # bias + ReLU (VPU, f32)
    # fc2: VPU multiply + sublane (XLU) reduction -- avoids an N=1 MXU matmul.
    v = jnp.sum(h * w2_ref[...], axis=0, keepdims=True) + b2_ref[0, 0]
    o_ref[...] = v.astype(o_ref.dtype)                         # [1, TB]


def _choose_batch_tile(B, S, H, block_b, x_itemsize):
    """Pick the batch tile: fat enough to amortize per-step overhead, small
    enough that 2 x-buffers + resident weights + the f32 [H, tb] intermediate
    fit the cross-generation VMEM budget, and (for large B) split into >= 4
    grid steps so v7x's two TensorCores both get work."""
    def vmem_need(tb):
        return (2 * tb * S * x_itemsize        # double-buffered x tiles
                + H * S * x_itemsize           # resident W1
                + 2 * H * 4                    # b1 / w2 columns
                + H * tb * 4                   # f32 [H, tb] intermediate
                + 2 * tb * 4)                  # double-buffered output row

    if B <= 512 and vmem_need(B) <= _VMEM_BUDGET:
        return B                               # one fat step; nothing to split
    tb = min(block_b, max(128, (pl.cdiv(B, 4) // 128) * 128))  # lane-aligned, >=4 steps
    while tb > 128 and vmem_need(tb) > _VMEM_BUDGET:
        tb = max(128, (tb // 2 // 128) * 128)
    return min(tb, B)


def value_net_forward(x, w1, b1, w2, b2, *, block_b=8192, compute_dtype=None):
    """ValueNet forward.

    x : [B, S]  input states (natural layout; never transposed or cast in HBM)
    w1: [H, S]  fc1.weight (PyTorch layout)
    b1: [H]     fc1.bias
    w2: [1, H]  fc2.weight (PyTorch layout)
    b2: [1]     fc2.bias
    returns [B, 1]
    """
    B, S = x.shape
    H = w1.shape[0]

    x_itemsize = jnp.dtype(x.dtype).itemsize
    tb = _choose_batch_tile(B, S, H, block_b, x_itemsize)
    grid = (pl.cdiv(B, tb),)
    # Partial last batch tile: out-of-bounds output lanes are masked on
    # writeback; batch lanes never mix, so garbage OOB x rows are harmless.

    # Tiny resident operands: reshape (and optionally cast) in the wrapper.
    b1_col = b1.reshape(H, 1).astype(jnp.float32)
    w2_col = w2.reshape(H, 1).astype(jnp.float32)
    b2_sc = b2.reshape(1, 1).astype(jnp.float32)
    if compute_dtype is not None:              # e.g. jnp.bfloat16 on v6e/v7x
        w1 = w1.astype(compute_dtype)          # tiny & resident: wrapper cast is fine
        # x is deliberately NOT cast here; the kernel casts after the load.

    cost = pl.CostEstimate(
        flops=2 * B * S * H + 2 * B * H,
        transcendentals=0,
        bytes_accessed=(x.size * x_itemsize
                        + w1.size * jnp.dtype(w1.dtype).itemsize
                        + (b1_col.size + w2_col.size + 1) * 4
                        + B * x_itemsize),
    )

    out = pl.pallas_call(
        value_net_kernel,
        out_shape=jax.ShapeDtypeStruct((1, B), x.dtype),
        grid=grid,
        in_specs=[
            pl.BlockSpec((tb, S), lambda i: (i, 0)),             # x: walks batch
            pl.BlockSpec((H, S), lambda i: (0, 0)),              # W1: resident
            pl.BlockSpec((H, 1), lambda i: (0, 0)),              # b1: resident
            pl.BlockSpec((H, 1), lambda i: (0, 0)),              # w2: resident
            pl.BlockSpec(memory_space=pltpu.MemorySpace.SMEM),   # b2 scalar
        ],
        out_specs=pl.BlockSpec((1, tb), lambda i: (0, i)),
        compiler_params=pltpu.CompilerParams(
            dimension_semantics=("parallel",),   # megacore-shards batch on v7x
            vmem_limit_bytes=_VMEM_BUDGET,
        ),
        cost_estimate=cost,
    )(x, w1, b1_col, w2_col, b2_sc)

    return out.reshape(B, 1)                     # back to PyTorch's [B, 1]


def init_params(key, state_dim, hidden_dim, dtype=jnp.float32):
    """Deterministic init mimicking torch.nn.Linear (uniform +/-1/sqrt(fan_in)),
    stored in PyTorch-native layouts."""
    k1, k2, k3, k4 = jax.random.split(key, 4)
    bound1 = 1.0 / jnp.sqrt(state_dim)
    bound2 = 1.0 / jnp.sqrt(hidden_dim)
    w1 = jax.random.uniform(k1, (hidden_dim, state_dim), dtype, -bound1, bound1)
    b1 = jax.random.uniform(k2, (hidden_dim,), dtype, -bound1, bound1)
    w2 = jax.random.uniform(k3, (1, hidden_dim), dtype, -bound2, bound2)
    b2 = jax.random.uniform(k4, (1,), dtype, -bound2, bound2)
    return w1, b1, w2, b2


if __name__ == "__main__":
    B, STATE_DIM, HIDDEN_DIM = 8, 16, 32

    key = jax.random.PRNGKey(0)
    k_x, k_p = jax.random.split(key)
    x = jax.random.normal(k_x, (B, STATE_DIM), jnp.float32)
    w1, b1, w2, b2 = init_params(k_p, STATE_DIM, HIDDEN_DIM)

    out = value_net_forward(x, w1, b1, w2, b2)
    out = jax.block_until_ready(out)

    # Pure-JAX reference of the PyTorch forward.
    ref = jnp.maximum(x @ w1.T + b1, 0.0) @ w2.T + b2
    assert out.shape == (B, 1)
    assert jnp.allclose(out, ref, atol=1e-5, rtol=1e-5)

    print("KERNEL_OK")
</pallas_src>

<mosaic_0001>
module attributes {stable_mosaic.version = 11 : i64} {
  func.func @value_net_kernel(%arg0: i32, %arg1: memref<8x16xf32, #tpu.memory_space<vmem>>, %arg2: memref<32x16xf32, #tpu.memory_space<vmem>>, %arg3: memref<32x1xf32, #tpu.memory_space<vmem>>, %arg4: memref<32x1xf32, #tpu.memory_space<vmem>>, %arg5: memref<1x1xf32, #tpu.memory_space<smem>>, %arg6: memref<1x8xf32, #tpu.memory_space<vmem>>) attributes {dimension_semantics = [#tpu.dimension_semantics<parallel>], iteration_bounds = array<i64: 1>, scalar_prefetch = 0 : i64, scratch_operands = 0 : i64, tpu.core_type = #tpu.core_type<tc>, window_params = [{transform_indices = @transform_0, window_bounds = array<i64: 8, 16>}, {pipeline_mode = #tpu.pipeline_mode<synchronous>, transform_indices = @transform_1, window_bounds = array<i64: 32, 16>}, {pipeline_mode = #tpu.pipeline_mode<synchronous>, transform_indices = @transform_2, window_bounds = array<i64: 32, 1>}, {pipeline_mode = #tpu.pipeline_mode<synchronous>, transform_indices = @transform_3, window_bounds = array<i64: 32, 1>}, {transform_indices = @transform_4, window_bounds = array<i64: 1, 1>}, {transform_indices = @transform_5, window_bounds = array<i64: 1, 8>}]} {
    %c0 = arith.constant 0 : index
    %c0_0 = arith.constant 0 : index
    %0 = vector.load %arg1[%c0, %c0_0] : memref<8x16xf32, #tpu.memory_space<vmem>>, vector<8x16xf32>
    %c0_1 = arith.constant 0 : index
    %c0_2 = arith.constant 0 : index
    %1 = vector.load %arg2[%c0_1, %c0_2] : memref<32x16xf32, #tpu.memory_space<vmem>>, vector<32x16xf32>
    %cst = arith.constant dense<0.000000e+00> : vector<32x8xf32>
    %2 = tpu.matmul %1, %0, %cst {dimension_numbers = #tpu.dot_dimension_numbers<[1], [1], [0], [0], [0, 0, 1, 0], [], []>} : vector<32x16xf32>, vector<8x16xf32>, vector<32x8xf32> -> vector<32x8xf32>
    %c0_3 = arith.constant 0 : index
    %c0_4 = arith.constant 0 : index
    %3 = vector.load %arg3[%c0_3, %c0_4] : memref<32x1xf32, #tpu.memory_space<vmem>>, vector<32x1xf32>
    %4 = vector.broadcast %3 : vector<32x1xf32> to vector<32x8xf32>
    %5 = arith.addf %2, %4 : vector<32x8xf32>
    %cst_5 = arith.constant 0.000000e+00 : f32
    %6 = vector.broadcast %cst_5 : f32 to vector<32x8xf32>
    %7 = arith.maximumf %5, %6 : vector<32x8xf32>
    %c0_6 = arith.constant 0 : index
    %c0_7 = arith.constant 0 : index
    %8 = vector.load %arg4[%c0_6, %c0_7] : memref<32x1xf32, #tpu.memory_space<vmem>>, vector<32x1xf32>
    %9 = vector.broadcast %8 : vector<32x1xf32> to vector<32x8xf32>
    %10 = arith.mulf %7, %9 : vector<32x8xf32>
    %cst_8 = arith.constant dense<0.000000e+00> : vector<8xf32>
    %11 = vector.multi_reduction <add>, %10, %cst_8 [0] : vector<32x8xf32> to vector<8xf32>
    %12 = vector.shape_cast %11 : vector<8xf32> to vector<1x8xf32>
    %c0_9 = arith.constant 0 : index
    %c0_10 = arith.constant 0 : index
    %13 = memref.load %arg5[%c0_9, %c0_10] : memref<1x1xf32, #tpu.memory_space<smem>>
    %14 = vector.broadcast %13 : f32 to vector<1x8xf32>
    %15 = arith.addf %12, %14 : vector<1x8xf32>
    %c0_11 = arith.constant 0 : index
    %c0_12 = arith.constant 0 : index
    %16 = vector.load %arg6[%c0_11, %c0_12] : memref<1x8xf32, #tpu.memory_space<vmem>>, vector<1x8xf32>
    tpu.vector_store %arg6[%c0_11, %c0_12], %15 {strides = array<i32>} : memref<1x8xf32, #tpu.memory_space<vmem>>, vector<1x8xf32>,
    return
  }
  func.func @transform_0(%arg0: i32) -> (i32, i32) {
    %c0_i32 = arith.constant 0 : i32
    %c0_i32_0 = arith.constant 0 : i32
    return %arg0, %c0_i32 : i32, i32
  }
  func.func @transform_1(%arg0: i32) -> (i32, i32) {
    %c0_i32 = arith.constant 0 : i32
    %c0_i32_0 = arith.constant 0 : i32
    %c0_i32_1 = arith.constant 0 : i32
    return %c0_i32, %c0_i32_0 : i32, i32
  }
  func.func @transform_2(%arg0: i32) -> (i32, i32) {
    %c0_i32 = arith.constant 0 : i32
    %c0_i32_0 = arith.constant 0 : i32
    %c0_i32_1 = arith.constant 0 : i32
    return %c0_i32, %c0_i32_0 : i32, i32
  }
  func.func @transform_3(%arg0: i32) -> (i32, i32) {
    %c0_i32 = arith.constant 0 : i32
    %c0_i32_0 = arith.constant 0 : i32
    %c0_i32_1 = arith.constant 0 : i32
    return %c0_i32, %c0_i32_0 : i32, i32
  }
  func.func @transform_4(%arg0: i32) -> (i32, i32) {
    %c0_i32 = arith.constant 0 : i32
    %c0_i32_0 = arith.constant 0 : i32
    %c0_i32_1 = arith.constant 0 : i32
    return %c0_i32, %c0_i32_0 : i32, i32
  }
  func.func @transform_5(%arg0: i32) -> (i32, i32) {
    %c0_i32 = arith.constant 0 : i32
    %c0_i32_0 = arith.constant 0 : i32
    return %c0_i32, %arg0 : i32, i32
  }
}

</mosaic_0001>

<llo_original>
// kernel: tpu_custom_call.1
$region0: #{tpu_custom_call.1}
  #allocation0 [shape = 'u32[]', space=smem, size = 0x4, offset = 0x4, fixed_abs, tag = 'smem constant byte address 0x4 - core index']
  #allocation1 [shape = 'u32[144,128]{1,0:T(1,128)}', space=vmem, size = 0x12000, scoped, tag = 'internal scratch']
  #allocation2 [shape = 'f32[1,1]{1,0:T(1,128)S(6)}', space=smem, size = 0x200, scoped, tag = 'scoped memory for tpu_custom_call.1']
  %s0 = inlined_call_operand.vmem [shape: f32[8,16], index: 0, kind: input, shape index: {}]
  %s1 = inlined_call_operand.vmem [shape: f32[32,16], index: 1, kind: input, shape index: {}]
  %s2 = inlined_call_operand.vmem [shape: f32[32,1], index: 2, kind: input, shape index: {}]
  %s3 = inlined_call_operand.vmem [shape: f32[32,1], index: 3, kind: input, shape index: {}]
  %s4 = inlined_call_operand.<no memory space> [shape: f32[1,1], index: 4, kind: input, shape index: {}]
  %s5 = inlined_call_operand.hbm [shape: f32[1,8], index: 5, kind: output, shape index: {}]
  %s6 = sld [smem:[#allocation0]]
  $region30: #{tpu_custom_call.1} parent=0
    _
  %s8 = ssub.s32 1, %s6
  %s9 = scalar_select 0, %s8, %s6
  %10 = sst [smem:[#allocation2]] %s4
  $region1: #{tpu_custom_call.1} parent=0
    #allocation3 [shape = 'u8[512]{0}', space=vmem, size = 0x400, scoped, tag = 'output window, operand 0, single buffered']
    #allocation4 [shape = 's32[1]{0}', space=sflag, size = 0x4, scoped, tag = 'scoped memory for tpu_custom_call.1']
    %11 = vsyncpa [#allocation4], 0
    // Predicated region
    $region2: #{tpu_custom_call.1} parent=1 // pred_check
      _
    $region3: #{tpu_custom_call.1} parent=1 // pred_check_branch
      %13 = sbr.rel (0) target = $region5
    $region4: #{tpu_custom_call.1} parent=1 // pred_region
      _
    $region5: #{tpu_custom_call.1} parent=1 // pred_fallthru
      _
    // Predicated region
    $region6: #{tpu_custom_call.1} parent=1 // pred_check
      _
    $region7: #{tpu_custom_call.1} parent=1 // pred_check_branch
      %15 = sbr.rel (0) target = $region9
    $region8: #{tpu_custom_call.1} parent=1 // pred_region
      _
    $region9: #{tpu_custom_call.1} parent=1 // pred_fallthru
      _
    // Predicated region
    $region10: #{tpu_custom_call.1} parent=1 // pred_check
      _
    $region11: #{tpu_custom_call.1} parent=1 // pred_check_branch
      %17 = sbr.rel (0) target = $region13
    $region12: #{tpu_custom_call.1} parent=1 // pred_region
      _
    $region13: #{tpu_custom_call.1} parent=1 // pred_fallthru
      _
    // Predicated region
    $region14: #{tpu_custom_call.1} parent=1 // pred_check
      _
    $region15: #{tpu_custom_call.1} parent=1 // pred_check_branch
      %19 = sbr.rel (0) target = $region17
    $region16: #{tpu_custom_call.1} parent=1 // pred_region
      _
    $region17: #{tpu_custom_call.1} parent=1 // pred_fallthru
      _
    // Predicated region
    $region18: #{tpu_custom_call.1} parent=1 // pred_check
      _
    $region19: #{tpu_custom_call.1} parent=1 // pred_check_branch
      %21 = sbr.rel (0) target = $region21
    $region20: #{tpu_custom_call.1} parent=1 // pred_region
      _
    $region21: #{tpu_custom_call.1} parent=1 // pred_fallthru
      _
    %v22 = vld [vmem:[%s0] sm:$0xff]
    %v23 = vld [vmem:[%s1] sm:$0xff]
    %v24 = vld [vmem:[%s1 + $0x8] sm:$0xff]
    %v25 = vld [vmem:[%s1 + $0x10] sm:$0xff]
    %v26 = vld [vmem:[%s1 + $0x18] sm:$0xff]
    %v27 = vld [vmem:[%s2] sm:$0xff]
    %v28 = vld [vmem:[%s2 + $0x8] sm:$0xff]
    %v29 = vld [vmem:[%s2 + $0x10] sm:$0xff]
    %v30 = vld [vmem:[%s2 + $0x18] sm:$0xff]
    %32 = vset.pattern.permute.xlu0 0
    %33 = vperm.xlu0 %32, %v27
    %v34 = vpop.permute.xlu0 %33
    %37 = vset.pattern.permute.xlu0 0
    %38 = vperm.xlu0 %37, %v28
    %v39 = vpop.permute.xlu0 %38
    %42 = vset.pattern.permute.xlu0 0
    %43 = vperm.xlu0 %42, %v29
    %v44 = vpop.permute.xlu0 %43
    %47 = vset.pattern.permute.xlu0 0
    %48 = vperm.xlu0 %47, %v30
    %v49 = vpop.permute.xlu0 %48
    %vm51 = vcmask 130048
    %v53 = vsel %vm51, %v23, 0
    %v56 = vsel %vm51, %v24, 0
    %v59 = vsel %vm51, %v25, 0
    %v62 = vsel %vm51, %v26, 0
    %v65 = vsel %vm51, %v22, 0
    %67 = vmatprep.subr.mxu0 0.0
    %68 = vmatpush1.xpose.msra.mxu0 0.0
    %69 = vmatprep.subr.mxu0 0.0
    %70 = vmatpush1.xpose.msra.mxu0 0.0
    %71 = vmatprep.subr.mxu0 0.0
    %72 = vmatpush1.xpose.msra.mxu0 0.0
    %73 = vmatprep.subr.mxu0 0.0
    %74 = vmatpush1.xpose.msra.mxu0 0.0
    %75 = vmatprep.subr.mxu0 0.0
    %76 = vmatpush1.xpose.msra.mxu0 0.0
    %77 = vmatprep.subr.mxu0 0.0
    %78 = vmatpush1.xpose.msra.mxu0 0.0
    %79 = vmatprep.subr.mxu0 0.0
    %80 = vmatpush1.xpose.msra.mxu0 0.0
    %81 = vmatprep.subr.mxu0 0.0
    %82 = vmatpush1.xpose.msra.mxu0 0.0
    %83 = vmatprep.subr.mxu0 0.0
    %84 = vmatpush1.xpose.msra.mxu0 0.0
    %85 = vmatprep.subr.mxu0 0.0
    %86 = vmatpush1.xpose.msra.mxu0 0.0
    %87 = vmatprep.subr.mxu0 0.0
    %88 = vmatpush1.xpose.msra.mxu0 0.0
    %89 = vmatprep.subr.mxu0 0.0
    %90 = vmatpush1.xpose.msra.mxu0 0.0
    %91 = vmatprep.subr.mxu0 0.0
    %92 = vmatpush1.xpose.msra.mxu0 0.0
    %93 = vmatprep.subr.mxu0 0.0
    %94 = vmatpush1.xpose.msra.mxu0 0.0
    %95 = vmatprep.subr.mxu0 0.0
    %96 = vmatpush1.xpose.msra.mxu0 0.0
    %97 = vmatprep.subr.mxu0 0.0
    %98 = vmatpush1.xpose.msra.mxu0 %v65
    %99 = vmatprep.subr.mxu0 0.0
    %100 = vmatpush2.xpose.msra.mxu0 0.0
    %101 = vmatprep.subr.mxu0 0.0
    %102 = vmatpush2.xpose.msra.mxu0 0.0
    %103 = vmatprep.subr.mxu0 0.0
    %104 = vmatpush2.xpose.msra.mxu0 0.0
    %105 = vmatprep.subr.mxu0 0.0
    %106 = vmatpush2.xpose.msra.mxu0 0.0
    %107 = vmatprep.subr.mxu0 0.0
    %108 = vmatpush2.xpose.msra.mxu0 0.0
    %109 = vmatprep.subr.mxu0 0.0
    %110 = vmatpush2.xpose.msra.mxu0 0.0
    %111 = vmatprep.subr.mxu0 0.0
    %112 = vmatpush2.xpose.msra.mxu0 0.0
    %113 = vmatprep.subr.mxu0 0.0
    %114 = vmatpush2.xpose.msra.mxu0 0.0
    %115 = vmatprep.subr.mxu0 0.0
    %116 = vmatpush2.xpose.msra.mxu0 0.0
    %117 = vmatprep.subr.mxu0 0.0
    %118 = vmatpush2.xpose.msra.mxu0 0.0
    %119 = vmatprep.subr.mxu0 0.0
    %120 = vmatpush2.xpose.msra.mxu0 0.0
    %121 = vmatprep.subr.mxu0 0.0
    %122 = vmatpush2.xpose.msra.mxu0 0.0
    %123 = vmatprep.subr.mxu0 0.0
    %124 = vmatpush2.xpose.msra.mxu0 0.0
    %125 = vmatprep.subr.mxu0 0.0
    %126 = vmatpush2.xpose.msra.mxu0 0.0
    %127 = vmatprep.subr.mxu0 0.0
    %128 = vmatpush2.xpose.msra.mxu0 0.0
    %129 = vmatprep.subr.mxu0 0.0
    %130 = vmatpush2.xpose.msra.mxu0 0.0
    %131 = vmatprep.mubr.f32.mxu0 0.0
    %132 = vmatmul.mubr.f32.gmra.mxu0 %v53
    %v133 = vpop.f32.mrf.mxu0
    %v134 = vadd.f32 %v34, %v133
    %v135 = vpop.f32.mrf.mxu0
    %136 = vmatprep.mubr.f32.mxu0 0.0
    %137 = vmatmul.mubr.f32.gmra.mxu0 %v56
    %v138 = vpop.f32.mrf.mxu0
    %v139 = vadd.f32 %v39, %v138
    %v140 = vpop.f32.mrf.mxu0
    %141 = vmatprep.mubr.f32.mxu0 0.0
    %142 = vmatmul.mubr.f32.gmra.mxu0 %v59
    %v143 = vpop.f32.mrf.mxu0
    %v144 = vadd.f32 %v44, %v143
    %v145 = vpop.f32.mrf.mxu0
    %146 = vmatprep.mubr.f32.mxu0 0.0
    %147 = vmatmul.mubr.f32.gmra.mxu0 %v62
    %v148 = vpop.f32.mrf.mxu0
    %v149 = vadd.f32 %v49, %v148
    %v150 = vpop.f32.mrf.mxu0
    %151 = vdwg.mxu0
    %v152 = vmax.f32 %v134, 0.0
    %v153 = vmax.f32 %v139, 0.0
    %v154 = vmax.f32 %v144, 0.0
    %v155 = vmax.f32 %v149, 0.0
    %v156 = vld [vmem:[%s3] sm:$0xff]
    %v157 = vld [vmem:[%s3 + $0x8] sm:$0xff]
    %v158 = vld [vmem:[%s3 + $0x10] sm:$0xff]
    %v159 = vld [vmem:[%s3 + $0x18] sm:$0xff]
    %161 = vset.pattern.permute.xlu0 0
    %162 = vperm.xlu0 %161, %v156
    %v163 = vpop.permute.xlu0 %162
    %166 = vset.pattern.permute.xlu0 0
    %167 = vperm.xlu0 %166, %v157
    %v168 = vpop.permute.xlu0 %167
    %171 = vset.pattern.permute.xlu0 0
    %172 = vperm.xlu0 %171, %v158
    %v173 = vpop.permute.xlu0 %172
    %176 = vset.pattern.permute.xlu0 0
    %177 = vperm.xlu0 %176, %v159
    %v178 = vpop.permute.xlu0 %177
    %v180 = vmul.f32 %v152, %v163
    %v181 = vmul.f32 %v153, %v168
    %v182 = vmul.f32 %v154, %v173
    %v183 = vmul.f32 %v155, %v178
    %vm184 = vcmask 64512
    %v185 = vsel %vm184, %v180, 0.0
    %v186 = vsel %vm184, %v181, 0.0
    %v187 = vadd.f32 %v185, %v186
    %v188 = vsel %vm184, %v182, 0.0
    %v189 = vadd.f32 %v187, %v188
    %v190 = vsel %vm184, %v183, 0.0
    %v191 = vadd.f32 %v189, %v190
    %v192 = vrot.slane %v191, 4
    %v193 = vadd.f32 %v191, %v192
    %v194 = vrot.slane %v193, 2
    %v195 = vadd.f32 %v193, %v194
    %v196 = vrot.slane %v195, 1
    %v197 = vadd.f32 %v195, %v196
    %s198 = sld [smem:[#allocation2]]
    %v199 = vstv %s198
    %v200 = vadd.f32 %v197, %v199
    %vm201 = vcmask 57344
    %202 = vst.msk [vmem:[#allocation3] sm:$0x1] %vm201, %v200
    // Predicated region
    $region22: #{tpu_custom_call.1} parent=1 // pred_check
      _
    $region23: #{tpu_custom_call.1} parent=1 // pred_check_branch
      %204 = sbr.rel (0) target = $region25
    $region24: #{tpu_custom_call.1} parent=1 // pred_region
      %s206 = ssub.s32 16, 16
      %207 = vsyncadd [#allocation4], %s206
      %s209 = sshll.u32 [#allocation3], 4
      %s210 = int_to_ptr.vmem [resolvable:$true] %s209
      %212 = dma.vmem_to_hbm [thread:$0]  %s210, 16, %s5, [#allocation4]
    $region25: #{tpu_custom_call.1} parent=1 // pred_fallthru
      _
    // Predicated region
    $region26: #{tpu_custom_call.1} parent=1 // pred_check
      _
    $region27: #{tpu_custom_call.1} parent=1 // pred_check_branch
      %214 = sbr.rel (0) target = $region29
    $region28: #{tpu_custom_call.1} parent=1 // pred_region
      %215 = dma.done [#allocation4], 16
    $region29: #{tpu_custom_call.1} parent=1 // pred_fallthru
      _
    %216 = vsyncpa [#allocation4], 1

</llo_original>
